<compile_context>
chip_gen: v7x
topology: tpu7x:2x2x1
jax: 0.10.0
libtpu: 0.0.40
codegen_flags: <defaults>
</compile_context>

<pallas_src>
import math
import functools

import jax
import jax.numpy as jnp
from jax.experimental import pallas as pl
from jax.experimental.pallas import tpu as pltpu  # noqa: F401  (TPU backend)


def _linear_socket_kernel(x_ref, w_ref, b_ref, o_ref, *,
                          scale, lr_mul, neg_slope, act_scale):
    """out = fused_lrelu((x @ w) * scale + bias*lr_mul) in one shot.

    x_ref: (B, D) bf16/f32   w_ref: (D, S) bf16/f32 (pre-transposed at init)
    b_ref: (1, S) f32        o_ref: (B, S) f32
    """
    # Canonical (M,K)x(K,N) contraction on the MXU, f32 accumulation.
    acc = jnp.dot(x_ref[...], w_ref[...], preferred_element_type=jnp.float32)
    # Equalized-lr weight scale folded into the f32 epilogue; bias * lr_mul.
    z = acc * scale + b_ref[...].astype(jnp.float32) * lr_mul
    # fused_leaky_relu: leaky_relu(., 0.2) * sqrt(2). Keep f32; cast at store.
    z = jnp.where(z >= 0, z, z * neg_slope)
    o_ref[...] = (z * act_scale).astype(o_ref.dtype)


def prepare_linear_socket_params(weight, bias, *, param_dtype=jnp.bfloat16):
    """One-time, parameter-load-time prep (NOT per forward).

    weight: (S, D) as in PyTorch  ->  returns (D, S) in `param_dtype`.
    bias:   (S,)                  ->  returns (1, S) f32.
    """
    w_t = jnp.asarray(weight).T.astype(param_dtype)      # pay transpose once, at init
    b = jnp.asarray(bias).reshape(1, -1).astype(jnp.float32)
    return w_t, b


def linear_socket_forward(x, w_t, b, *, lr_mul=1.0, compute_dtype=jnp.bfloat16):
    """x: (B, C, H, W). w_t: (D, S) prepared weight. b: (1, S) f32 bias."""
    B = x.shape[0]
    D = x.shape[1] * x.shape[2] * x.shape[3]
    S = w_t.shape[1]
    assert w_t.shape == (D, S)
    assert b.shape == (1, S)

    scale = (1.0 / math.sqrt(D)) * lr_mul   # EqualLinear equalized-lr scale

    y = x.reshape(B, D).astype(compute_dtype)   # torch.flatten(x, start_dim=1)

    kernel = functools.partial(
        _linear_socket_kernel,
        scale=float(scale),
        lr_mul=float(lr_mul),
        neg_slope=0.2,
        act_scale=math.sqrt(2.0),
    )

    bytes_accessed = (jnp.dtype(y.dtype).itemsize * B * D
                      + jnp.dtype(w_t.dtype).itemsize * D * S
                      + 4 * S + 4 * B * S)

    # Whole problem fits trivially in VMEM -> no grid, no reduction phases,
    # no scratch accumulator, no extra buffering (see header comments).
    return pl.pallas_call(
        kernel,
        out_shape=jax.ShapeDtypeStruct((B, S), jnp.float32),
        in_specs=[
            pl.BlockSpec((B, D), lambda: (0, 0)),   # x  (full block)
            pl.BlockSpec((D, S), lambda: (0, 0)),   # w  (full block, pre-transposed)
            pl.BlockSpec((1, S), lambda: (0, 0)),   # bias
        ],
        out_specs=pl.BlockSpec((B, S), lambda: (0, 0)),
        cost_estimate=pl.CostEstimate(
            flops=2 * B * S * D,
            bytes_accessed=int(bytes_accessed),
            transcendentals=0,
        ),
    )(y, w_t, b)


def linear_socket_reference(x, weight, bias, *, lr_mul=1.0):
    """Pure-JAX f32 reference mirroring the PyTorch module exactly."""
    B = x.shape[0]
    D = x.shape[1] * x.shape[2] * x.shape[3]
    scale = (1.0 / math.sqrt(D)) * lr_mul
    y = x.reshape(B, D)
    out = y @ (weight * scale).T + bias * lr_mul
    out = jnp.where(out >= 0, out, out * 0.2) * math.sqrt(2.0)
    return out


if __name__ == "__main__":
    # LinearSocket(in_ch=4, in_h=16, in_w=16, style_dim=32)
    B, C, H, W = 2, 4, 16, 16
    style_dim = 32
    D = C * H * W  # 1024

    key = jax.random.PRNGKey(0)
    kx, kw = jax.random.split(key)

    x = jax.random.normal(kx, (B, C, H, W), dtype=jnp.float32)
    # EqualLinear.__init__: weight = randn(out_dim, in_dim) / lr_mul; bias = zeros(out_dim)
    lr_mul = 1.0
    weight = jax.random.normal(kw, (style_dim, D), dtype=jnp.float32) / lr_mul
    bias = jnp.zeros((style_dim,), dtype=jnp.float32)

    ref = linear_socket_reference(x, weight, bias, lr_mul=lr_mul)

    # 1) Exact-semantics check: f32 params / f32 compute path, tight tolerance.
    w_f32, b_f32 = prepare_linear_socket_params(weight, bias, param_dtype=jnp.float32)
    out_f32 = linear_socket_forward(x, w_f32, b_f32, lr_mul=lr_mul,
                                    compute_dtype=jnp.float32)
    out_f32 = jax.block_until_ready(out_f32)
    assert out_f32.shape == (B, style_dim)
    assert jnp.allclose(out_f32, ref, atol=1e-4, rtol=1e-4), "f32 mismatch vs reference"

    # 2) Production path: bf16 params/x (halved weight DMA), f32 accumulation
    #    and f32 epilogue in-kernel. Tolerance loosened for bf16 inputs.
    w_bf16, b_bf16 = prepare_linear_socket_params(weight, bias, param_dtype=jnp.bfloat16)
    out = linear_socket_forward(x, w_bf16, b_bf16, lr_mul=lr_mul,
                                compute_dtype=jnp.bfloat16)
    out = jax.block_until_ready(out)
    assert out.shape == (B, style_dim)
    assert jnp.allclose(out, ref, atol=2e-2, rtol=2e-2), "bf16 mismatch vs reference"

    print("KERNEL_OK")
</pallas_src>

<mosaic_0001>
module attributes {stable_mosaic.version = 11 : i64} {
  func.func @_linear_socket_kernel(%arg0: memref<2x1024xf32, #tpu.memory_space<vmem>>, %arg1: memref<1024x32xf32, #tpu.memory_space<vmem>>, %arg2: memref<1x32xf32, #tpu.memory_space<vmem>>, %arg3: memref<2x32xf32, #tpu.memory_space<vmem>>) attributes {dimension_semantics = [], scalar_prefetch = 0 : i64, scratch_operands = 0 : i64, tpu.core_type = #tpu.core_type<tc>} {
    %c0 = arith.constant 0 : index
    %c0_0 = arith.constant 0 : index
    %0 = vector.load %arg0[%c0, %c0_0] : memref<2x1024xf32, #tpu.memory_space<vmem>>, vector<2x1024xf32>
    %c0_1 = arith.constant 0 : index
    %c0_2 = arith.constant 0 : index
    %1 = vector.load %arg1[%c0_1, %c0_2] : memref<1024x32xf32, #tpu.memory_space<vmem>>, vector<1024x32xf32>
    %cst = arith.constant dense<0.000000e+00> : vector<2x32xf32>
    %2 = tpu.matmul %0, %1, %cst {dimension_numbers = #tpu.dot_dimension_numbers<[1], [0], [0], [1], [0, 0, 1, 1], [], []>} : vector<2x1024xf32>, vector<1024x32xf32>, vector<2x32xf32> -> vector<2x32xf32>
    %cst_3 = arith.constant 3.125000e-02 : f32
    %3 = vector.broadcast %cst_3 : f32 to vector<2x32xf32>
    %4 = arith.mulf %2, %3 : vector<2x32xf32>
    %c0_4 = arith.constant 0 : index
    %c0_5 = arith.constant 0 : index
    %5 = vector.load %arg2[%c0_4, %c0_5] : memref<1x32xf32, #tpu.memory_space<vmem>>, vector<1x32xf32>
    %cst_6 = arith.constant 1.000000e+00 : f32
    %6 = vector.broadcast %cst_6 : f32 to vector<1x32xf32>
    %7 = arith.mulf %5, %6 : vector<1x32xf32>
    %8 = vector.broadcast %7 : vector<1x32xf32> to vector<2x32xf32>
    %9 = arith.addf %4, %8 : vector<2x32xf32>
    %cst_7 = arith.constant 0.000000e+00 : f32
    %10 = vector.broadcast %cst_7 : f32 to vector<2x32xf32>
    %11 = arith.cmpf oge, %9, %10 : vector<2x32xf32>
    %cst_8 = arith.constant 2.000000e-01 : f32
    %12 = vector.broadcast %cst_8 : f32 to vector<2x32xf32>
    %13 = arith.mulf %9, %12 : vector<2x32xf32>
    %14 = arith.select %11, %9, %13 : vector<2x32xi1>, vector<2x32xf32>
    %cst_9 = arith.constant 1.41421354 : f32
    %15 = vector.broadcast %cst_9 : f32 to vector<2x32xf32>
    %16 = arith.mulf %14, %15 : vector<2x32xf32>
    %c0_10 = arith.constant 0 : index
    %c0_11 = arith.constant 0 : index
    %17 = vector.load %arg3[%c0_10, %c0_11] : memref<2x32xf32, #tpu.memory_space<vmem>>, vector<2x32xf32>
    tpu.vector_store %arg3[%c0_10, %c0_11], %16 {strides = array<i32>} : memref<2x32xf32, #tpu.memory_space<vmem>>, vector<2x32xf32>,
    return
  }
}

</mosaic_0001>

<llo_original>
// kernel: tpu_custom_call.1
$region0: #{tpu_custom_call.1}
  #allocation0 [shape = 'u32[]', space=smem, size = 0x4, offset = 0x4, fixed_abs, tag = 'smem constant byte address 0x4 - core index']
  #allocation1 [shape = 'u32[144,128]{1,0:T(1,128)}', space=vmem, size = 0x12000, scoped, tag = 'internal scratch']
  %s0 = inlined_call_operand.vmem [shape: f32[2,1024], index: 0, kind: input, shape index: {}]
  %s1 = inlined_call_operand.vmem [shape: f32[1024,32], index: 1, kind: input, shape index: {}]
  %s2 = inlined_call_operand.vmem [shape: f32[1,32], index: 2, kind: input, shape index: {}]
  %s3 = inlined_call_operand.hbm [shape: f32[2,32], index: 3, kind: output, shape index: {}]
  %s4 = sld [smem:[#allocation0]]
  $region22: #{tpu_custom_call.1} parent=0
    _
  %s6 = ssub.s32 1, %s4
  %s7 = scalar_select 0, %s6, %s4
  $region1: #{tpu_custom_call.1} parent=0
    #allocation2 [shape = 'u8[1024]{0}', space=vmem, size = 0x400, scoped, tag = 'output window, operand 0, single buffered']
    #allocation3 [shape = 's32[1]{0}', space=sflag, size = 0x4, scoped, tag = 'scoped memory for tpu_custom_call.1']
    %8 = vsyncpa [#allocation3], 0
    // Predicated region
    $region2: #{tpu_custom_call.1} parent=1 // pred_check
      _
    $region3: #{tpu_custom_call.1} parent=1 // pred_check_branch
      %10 = sbr.rel (0) target = $region5
    $region4: #{tpu_custom_call.1} parent=1 // pred_region
      _
    $region5: #{tpu_custom_call.1} parent=1 // pred_fallthru
      _
    // Predicated region
    $region6: #{tpu_custom_call.1} parent=1 // pred_check
      _
    $region7: #{tpu_custom_call.1} parent=1 // pred_check_branch
      %12 = sbr.rel (0) target = $region9
    $region8: #{tpu_custom_call.1} parent=1 // pred_region
      _
    $region9: #{tpu_custom_call.1} parent=1 // pred_fallthru
      _
    // Predicated region
    $region10: #{tpu_custom_call.1} parent=1 // pred_check
      _
    $region11: #{tpu_custom_call.1} parent=1 // pred_check_branch
      %14 = sbr.rel (0) target = $region13
    $region12: #{tpu_custom_call.1} parent=1 // pred_region
      _
    $region13: #{tpu_custom_call.1} parent=1 // pred_fallthru
      _
    %v15 = vld [vmem:[%s0] sm:$0xff]
    %v16 = vld [vmem:[%s0 + $0x8] sm:$0xff]
    %v17 = vld [vmem:[%s1] sm:$0xff]
    %v18 = vld [vmem:[%s1 + $0x8] sm:$0xff]
    %v19 = vld [vmem:[%s1 + $0x10] sm:$0xff]
    %v20 = vld [vmem:[%s1 + $0x18] sm:$0xff]
    %v21 = vld [vmem:[%s1 + $0x20] sm:$0xff]
    %v22 = vld [vmem:[%s1 + $0x28] sm:$0xff]
    %v23 = vld [vmem:[%s1 + $0x30] sm:$0xff]
    %v24 = vld [vmem:[%s1 + $0x38] sm:$0xff]
    %v25 = vld [vmem:[%s1 + $0x40] sm:$0xff]
    %v26 = vld [vmem:[%s1 + $0x48] sm:$0xff]
    %v27 = vld [vmem:[%s1 + $0x50] sm:$0xff]
    %v28 = vld [vmem:[%s1 + $0x58] sm:$0xff]
    %v29 = vld [vmem:[%s1 + $0x60] sm:$0xff]
    %v30 = vld [vmem:[%s1 + $0x68] sm:$0xff]
    %v31 = vld [vmem:[%s1 + $0x70] sm:$0xff]
    %v32 = vld [vmem:[%s1 + $0x78] sm:$0xff]
    %v33 = vld [vmem:[%s1 + $0x80] sm:$0xff]
    %v34 = vld [vmem:[%s1 + $0x88] sm:$0xff]
    %v35 = vld [vmem:[%s1 + $0x90] sm:$0xff]
    %v36 = vld [vmem:[%s1 + $0x98] sm:$0xff]
    %v37 = vld [vmem:[%s1 + $0xa0] sm:$0xff]
    %v38 = vld [vmem:[%s1 + $0xa8] sm:$0xff]
    %v39 = vld [vmem:[%s1 + $0xb0] sm:$0xff]
    %v40 = vld [vmem:[%s1 + $0xb8] sm:$0xff]
    %v41 = vld [vmem:[%s1 + $0xc0] sm:$0xff]
    %v42 = vld [vmem:[%s1 + $0xc8] sm:$0xff]
    %v43 = vld [vmem:[%s1 + $0xd0] sm:$0xff]
    %v44 = vld [vmem:[%s1 + $0xd8] sm:$0xff]
    %v45 = vld [vmem:[%s1 + $0xe0] sm:$0xff]
    %v46 = vld [vmem:[%s1 + $0xe8] sm:$0xff]
    %v47 = vld [vmem:[%s1 + $0xf0] sm:$0xff]
    %v48 = vld [vmem:[%s1 + $0xf8] sm:$0xff]
    %v49 = vld [vmem:[%s1 + $0x100] sm:$0xff]
    %v50 = vld [vmem:[%s1 + $0x108] sm:$0xff]
    %v51 = vld [vmem:[%s1 + $0x110] sm:$0xff]
    %v52 = vld [vmem:[%s1 + $0x118] sm:$0xff]
    %v53 = vld [vmem:[%s1 + $0x120] sm:$0xff]
    %v54 = vld [vmem:[%s1 + $0x128] sm:$0xff]
    %v55 = vld [vmem:[%s1 + $0x130] sm:$0xff]
    %v56 = vld [vmem:[%s1 + $0x138] sm:$0xff]
    %v57 = vld [vmem:[%s1 + $0x140] sm:$0xff]
    %v58 = vld [vmem:[%s1 + $0x148] sm:$0xff]
    %v59 = vld [vmem:[%s1 + $0x150] sm:$0xff]
    %v60 = vld [vmem:[%s1 + $0x158] sm:$0xff]
    %v61 = vld [vmem:[%s1 + $0x160] sm:$0xff]
    %v62 = vld [vmem:[%s1 + $0x168] sm:$0xff]
    %v63 = vld [vmem:[%s1 + $0x170] sm:$0xff]
    %v64 = vld [vmem:[%s1 + $0x178] sm:$0xff]
    %v65 = vld [vmem:[%s1 + $0x180] sm:$0xff]
    %v66 = vld [vmem:[%s1 + $0x188] sm:$0xff]
    %v67 = vld [vmem:[%s1 + $0x190] sm:$0xff]
    %v68 = vld [vmem:[%s1 + $0x198] sm:$0xff]
    %v69 = vld [vmem:[%s1 + $0x1a0] sm:$0xff]
    %v70 = vld [vmem:[%s1 + $0x1a8] sm:$0xff]
    %v71 = vld [vmem:[%s1 + $0x1b0] sm:$0xff]
    %v72 = vld [vmem:[%s1 + $0x1b8] sm:$0xff]
    %v73 = vld [vmem:[%s1 + $0x1c0] sm:$0xff]
    %v74 = vld [vmem:[%s1 + $0x1c8] sm:$0xff]
    %v75 = vld [vmem:[%s1 + $0x1d0] sm:$0xff]
    %v76 = vld [vmem:[%s1 + $0x1d8] sm:$0xff]
    %v77 = vld [vmem:[%s1 + $0x1e0] sm:$0xff]
    %v78 = vld [vmem:[%s1 + $0x1e8] sm:$0xff]
    %v79 = vld [vmem:[%s1 + $0x1f0] sm:$0xff]
    %v80 = vld [vmem:[%s1 + $0x1f8] sm:$0xff]
    %v81 = vld [vmem:[%s1 + $0x200] sm:$0xff]
    %v82 = vld [vmem:[%s1 + $0x208] sm:$0xff]
    %v83 = vld [vmem:[%s1 + $0x210] sm:$0xff]
    %v84 = vld [vmem:[%s1 + $0x218] sm:$0xff]
    %v85 = vld [vmem:[%s1 + $0x220] sm:$0xff]
    %v86 = vld [vmem:[%s1 + $0x228] sm:$0xff]
    %v87 = vld [vmem:[%s1 + $0x230] sm:$0xff]
    %v88 = vld [vmem:[%s1 + $0x238] sm:$0xff]
    %v89 = vld [vmem:[%s1 + $0x240] sm:$0xff]
    %v90 = vld [vmem:[%s1 + $0x248] sm:$0xff]
    %v91 = vld [vmem:[%s1 + $0x250] sm:$0xff]
    %v92 = vld [vmem:[%s1 + $0x258] sm:$0xff]
    %v93 = vld [vmem:[%s1 + $0x260] sm:$0xff]
    %v94 = vld [vmem:[%s1 + $0x268] sm:$0xff]
    %v95 = vld [vmem:[%s1 + $0x270] sm:$0xff]
    %v96 = vld [vmem:[%s1 + $0x278] sm:$0xff]
    %v97 = vld [vmem:[%s1 + $0x280] sm:$0xff]
    %v98 = vld [vmem:[%s1 + $0x288] sm:$0xff]
    %v99 = vld [vmem:[%s1 + $0x290] sm:$0xff]
    %v100 = vld [vmem:[%s1 + $0x298] sm:$0xff]
    %v101 = vld [vmem:[%s1 + $0x2a0] sm:$0xff]
    %v102 = vld [vmem:[%s1 + $0x2a8] sm:$0xff]
    %v103 = vld [vmem:[%s1 + $0x2b0] sm:$0xff]
    %v104 = vld [vmem:[%s1 + $0x2b8] sm:$0xff]
    %v105 = vld [vmem:[%s1 + $0x2c0] sm:$0xff]
    %v106 = vld [vmem:[%s1 + $0x2c8] sm:$0xff]
    %v107 = vld [vmem:[%s1 + $0x2d0] sm:$0xff]
    %v108 = vld [vmem:[%s1 + $0x2d8] sm:$0xff]
    %v109 = vld [vmem:[%s1 + $0x2e0] sm:$0xff]
    %v110 = vld [vmem:[%s1 + $0x2e8] sm:$0xff]
    %v111 = vld [vmem:[%s1 + $0x2f0] sm:$0xff]
    %v112 = vld [vmem:[%s1 + $0x2f8] sm:$0xff]
    %v113 = vld [vmem:[%s1 + $0x300] sm:$0xff]
    %v114 = vld [vmem:[%s1 + $0x308] sm:$0xff]
    %v115 = vld [vmem:[%s1 + $0x310] sm:$0xff]
    %v116 = vld [vmem:[%s1 + $0x318] sm:$0xff]
    %v117 = vld [vmem:[%s1 + $0x320] sm:$0xff]
    %v118 = vld [vmem:[%s1 + $0x328] sm:$0xff]
    %v119 = vld [vmem:[%s1 + $0x330] sm:$0xff]
    %v120 = vld [vmem:[%s1 + $0x338] sm:$0xff]
    %v121 = vld [vmem:[%s1 + $0x340] sm:$0xff]
    %v122 = vld [vmem:[%s1 + $0x348] sm:$0xff]
    %v123 = vld [vmem:[%s1 + $0x350] sm:$0xff]
    %v124 = vld [vmem:[%s1 + $0x358] sm:$0xff]
    %v125 = vld [vmem:[%s1 + $0x360] sm:$0xff]
    %v126 = vld [vmem:[%s1 + $0x368] sm:$0xff]
    %v127 = vld [vmem:[%s1 + $0x370] sm:$0xff]
    %v128 = vld [vmem:[%s1 + $0x378] sm:$0xff]
    %v129 = vld [vmem:[%s1 + $0x380] sm:$0xff]
    %v130 = vld [vmem:[%s1 + $0x388] sm:$0xff]
    %v131 = vld [vmem:[%s1 + $0x390] sm:$0xff]
    %v132 = vld [vmem:[%s1 + $0x398] sm:$0xff]
    %v133 = vld [vmem:[%s1 + $0x3a0] sm:$0xff]
    %v134 = vld [vmem:[%s1 + $0x3a8] sm:$0xff]
    %v135 = vld [vmem:[%s1 + $0x3b0] sm:$0xff]
    %v136 = vld [vmem:[%s1 + $0x3b8] sm:$0xff]
    %v137 = vld [vmem:[%s1 + $0x3c0] sm:$0xff]
    %v138 = vld [vmem:[%s1 + $0x3c8] sm:$0xff]
    %v139 = vld [vmem:[%s1 + $0x3d0] sm:$0xff]
    %v140 = vld [vmem:[%s1 + $0x3d8] sm:$0xff]
    %v141 = vld [vmem:[%s1 + $0x3e0] sm:$0xff]
    %v142 = vld [vmem:[%s1 + $0x3e8] sm:$0xff]
    %v143 = vld [vmem:[%s1 + $0x3f0] sm:$0xff]
    %v144 = vld [vmem:[%s1 + $0x3f8] sm:$0xff]
    %v147 = vcombine.high %v15, %v15
    %v149 = vunpack.c.l.s4 1983009808
    %v150 = vunpack.c.0.s8 %v149
    %v151 = vlaneseq
    %v152 = vshrl.u32 %v151, 7
    %v153 = vsub.s32 %v150, %v152
    %v154 = vrot.slane %v15, %v153
    %v156 = vunpack.c.l.s4 1983009808
    %v157 = vunpack.c.0.s8 %v156
    %v158 = vlaneseq
    %v159 = vshrl.u32 %v158, 7
    %v160 = vsub.s32 %v157, %v159
    %v161 = vrot.slane %v147, %v160
    %v162 = vcombine.high %v154, %v154
    %v163 = vcombine.high %v161, %v161
    %v164 = vcombine.high %v16, %v16
    %v166 = vunpack.c.l.s4 1983009808
    %v167 = vunpack.c.0.s8 %v166
    %v168 = vlaneseq
    %v169 = vshrl.u32 %v168, 7
    %v170 = vsub.s32 %v167, %v169
    %v171 = vrot.slane %v16, %v170
    %v173 = vunpack.c.l.s4 1983009808
    %v174 = vunpack.c.0.s8 %v173
    %v175 = vlaneseq
    %v176 = vshrl.u32 %v175, 7
    %v177 = vsub.s32 %v174, %v176
    %v178 = vrot.slane %v164, %v177
    %v179 = vcombine.high %v171, %v171
    %v180 = vcombine.high %v178, %v178
    %189 = vmatprep.subr.mxu0 0.0
    %190 = vmatpush1.msra.mxu0 %v17
    %191 = vmatprep.subr.mxu0 0.0
    %192 = vmatpush1.msra.mxu0 %v18
    %193 = vmatprep.subr.mxu0 0.0
    %194 = vmatpush1.msra.mxu0 %v19
    %195 = vmatprep.subr.mxu0 0.0
    %196 = vmatpush1.msra.mxu0 %v20
    %197 = vmatprep.subr.mxu0 0.0
    %198 = vmatpush1.msra.mxu0 %v21
    %199 = vmatprep.subr.mxu0 0.0
    %200 = vmatpush1.msra.mxu0 %v22
    %201 = vmatprep.subr.mxu0 0.0
    %202 = vmatpush1.msra.mxu0 %v23
    %203 = vmatprep.subr.mxu0 0.0
    %204 = vmatpush1.msra.mxu0 %v24
    %205 = vmatprep.subr.mxu0 0.0
    %206 = vmatpush1.msra.mxu0 %v25
    %207 = vmatprep.subr.mxu0 0.0
    %208 = vmatpush1.msra.mxu0 %v26
    %209 = vmatprep.subr.mxu0 0.0
    %210 = vmatpush1.msra.mxu0 %v27
    %211 = vmatprep.subr.mxu0 0.0
    %212 = vmatpush1.msra.mxu0 %v28
    %213 = vmatprep.subr.mxu0 0.0
    %214 = vmatpush1.msra.mxu0 %v29
    %215 = vmatprep.subr.mxu0 0.0
    %216 = vmatpush1.msra.mxu0 %v30
    %217 = vmatprep.subr.mxu0 0.0
    %218 = vmatpush1.msra.mxu0 %v31
    %219 = vmatprep.subr.mxu0 0.0
    %220 = vmatpush1.msra.mxu0 %v32
    %221 = vmatprep.subr.mxu0 0.0
    %222 = vmatpush1.msra.mxu0 %v33
    %223 = vmatprep.subr.mxu0 0.0
    %224 = vmatpush1.msra.mxu0 %v34
    %225 = vmatprep.subr.mxu0 0.0
    %226 = vmatpush1.msra.mxu0 %v35
    %227 = vmatprep.subr.mxu0 0.0
    %228 = vmatpush1.msra.mxu0 %v36
    %229 = vmatprep.subr.mxu0 0.0
    %230 = vmatpush1.msra.mxu0 %v37
    %231 = vmatprep.subr.mxu0 0.0
    %232 = vmatpush1.msra.mxu0 %v38
    %233 = vmatprep.subr.mxu0 0.0
    %234 = vmatpush1.msra.mxu0 %v39
    %235 = vmatprep.subr.mxu0 0.0
    %236 = vmatpush1.msra.mxu0 %v40
    %237 = vmatprep.subr.mxu0 0.0
    %238 = vmatpush1.msra.mxu0 %v41
    %239 = vmatprep.subr.mxu0 0.0
    %240 = vmatpush1.msra.mxu0 %v42
    %241 = vmatprep.subr.mxu0 0.0
    %242 = vmatpush1.msra.mxu0 %v43
    %243 = vmatprep.subr.mxu0 0.0
    %244 = vmatpush1.msra.mxu0 %v44
    %245 = vmatprep.subr.mxu0 0.0
    %246 = vmatpush1.msra.mxu0 %v45
    %247 = vmatprep.subr.mxu0 0.0
    %248 = vmatpush1.msra.mxu0 %v46
    %249 = vmatprep.subr.mxu0 0.0
    %250 = vmatpush1.msra.mxu0 %v47
    %251 = vmatprep.subr.mxu0 0.0
    %252 = vmatpush1.msra.mxu0 %v48
    %253 = vmatprep.mubr.f32.mxu0 %v162
    %254 = vmatmul.mubr.f32.gmra.mrb[0].mxu0 %v154
    %v255 = vpop.f32.mrb[0].mxu0
    %v256 = vadd.f32 0.0, %v255
    %v257 = vpop.f32.mrb[0].mxu0
    %258 = vdwg.mxu0
    %259 = vmatprep.subr.mxu0 0.0
    %260 = vmatpush1.msra.mxu0 %v49
    %261 = vmatprep.subr.mxu0 0.0
    %262 = vmatpush1.msra.mxu0 %v50
    %263 = vmatprep.subr.mxu0 0.0
    %264 = vmatpush1.msra.mxu0 %v51
    %265 = vmatprep.subr.mxu0 0.0
    %266 = vmatpush1.msra.mxu0 %v52
    %267 = vmatprep.subr.mxu0 0.0
    %268 = vmatpush1.msra.mxu0 %v53
    %269 = vmatprep.subr.mxu0 0.0
    %270 = vmatpush1.msra.mxu0 %v54
    %271 = vmatprep.subr.mxu0 0.0
    %272 = vmatpush1.msra.mxu0 %v55
    %273 = vmatprep.subr.mxu0 0.0
    %274 = vmatpush1.msra.mxu0 %v56
    %275 = vmatprep.subr.mxu0 0.0
    %276 = vmatpush1.msra.mxu0 %v57
    %277 = vmatprep.subr.mxu0 0.0
    %278 = vmatpush1.msra.mxu0 %v58
    %279 = vmatprep.subr.mxu0 0.0
    %280 = vmatpush1.msra.mxu0 %v59
    %281 = vmatprep.subr.mxu0 0.0
    %282 = vmatpush1.msra.mxu0 %v60
    %283 = vmatprep.subr.mxu0 0.0
    %284 = vmatpush1.msra.mxu0 %v61
    %285 = vmatprep.subr.mxu0 0.0
    %286 = vmatpush1.msra.mxu0 %v62
    %287 = vmatprep.subr.mxu0 0.0
    %288 = vmatpush1.msra.mxu0 %v63
    %289 = vmatprep.subr.mxu0 0.0
    %290 = vmatpush1.msra.mxu0 %v64
    %291 = vmatprep.subr.mxu0 0.0
    %292 = vmatpush1.msra.mxu0 %v65
    %293 = vmatprep.subr.mxu0 0.0
    %294 = vmatpush1.msra.mxu0 %v66
    %295 = vmatprep.subr.mxu0 0.0
    %296 = vmatpush1.msra.mxu0 %v67
    %297 = vmatprep.subr.mxu0 0.0
    %298 = vmatpush1.msra.mxu0 %v68
    %299 = vmatprep.subr.mxu0 0.0
    %300 = vmatpush1.msra.mxu0 %v69
    %301 = vmatprep.subr.mxu0 0.0
    %302 = vmatpush1.msra.mxu0 %v70
    %303 = vmatprep.subr.mxu0 0.0
    %304 = vmatpush1.msra.mxu0 %v71
    %305 = vmatprep.subr.mxu0 0.0
    %306 = vmatpush1.msra.mxu0 %v72
    %307 = vmatprep.subr.mxu0 0.0
    %308 = vmatpush1.msra.mxu0 %v73
    %309 = vmatprep.subr.mxu0 0.0
    %310 = vmatpush1.msra.mxu0 %v74
    %311 = vmatprep.subr.mxu0 0.0
    %312 = vmatpush1.msra.mxu0 %v75
    %313 = vmatprep.subr.mxu0 0.0
    %314 = vmatpush1.msra.mxu0 %v76
    %315 = vmatprep.subr.mxu0 0.0
    %316 = vmatpush1.msra.mxu0 %v77
    %317 = vmatprep.subr.mxu0 0.0
    %318 = vmatpush1.msra.mxu0 %v78
    %319 = vmatprep.subr.mxu0 0.0
    %320 = vmatpush1.msra.mxu0 %v79
    %321 = vmatprep.subr.mxu0 0.0
    %322 = vmatpush1.msra.mxu0 %v80
    %323 = vmatprep.mubr.f32.mxu0 %v163
    %324 = vmatmul.mubr.f32.gmra.mrb[0].mxu0 %v161
    %v325 = vpop.f32.mrb[0].mxu0
    %v326 = vadd.f32 %v256, %v325
    %v327 = vpop.f32.mrb[0].mxu0
    %328 = vdwg.mxu0
    %329 = vmatprep.subr.mxu0 0.0
    %330 = vmatpush1.msra.mxu0 %v81
    %331 = vmatprep.subr.mxu0 0.0
    %332 = vmatpush1.msra.mxu0 %v82
    %333 = vmatprep.subr.mxu0 0.0
    %334 = vmatpush1.msra.mxu0 %v83
    %335 = vmatprep.subr.mxu0 0.0
    %336 = vmatpush1.msra.mxu0 %v84
    %337 = vmatprep.subr.mxu0 0.0
    %338 = vmatpush1.msra.mxu0 %v85
    %339 = vmatprep.subr.mxu0 0.0
    %340 = vmatpush1.msra.mxu0 %v86
    %341 = vmatprep.subr.mxu0 0.0
    %342 = vmatpush1.msra.mxu0 %v87
    %343 = vmatprep.subr.mxu0 0.0
    %344 = vmatpush1.msra.mxu0 %v88
    %345 = vmatprep.subr.mxu0 0.0
    %346 = vmatpush1.msra.mxu0 %v89
    %347 = vmatprep.subr.mxu0 0.0
    %348 = vmatpush1.msra.mxu0 %v90
    %349 = vmatprep.subr.mxu0 0.0
    %350 = vmatpush1.msra.mxu0 %v91
    %351 = vmatprep.subr.mxu0 0.0
    %352 = vmatpush1.msra.mxu0 %v92
    %353 = vmatprep.subr.mxu0 0.0
    %354 = vmatpush1.msra.mxu0 %v93
    %355 = vmatprep.subr.mxu0 0.0
    %356 = vmatpush1.msra.mxu0 %v94
    %357 = vmatprep.subr.mxu0 0.0
    %358 = vmatpush1.msra.mxu0 %v95
    %359 = vmatprep.subr.mxu0 0.0
    %360 = vmatpush1.msra.mxu0 %v96
    %361 = vmatprep.subr.mxu0 0.0
    %362 = vmatpush1.msra.mxu0 %v97
    %363 = vmatprep.subr.mxu0 0.0
    %364 = vmatpush1.msra.mxu0 %v98
    %365 = vmatprep.subr.mxu0 0.0
    %366 = vmatpush1.msra.mxu0 %v99
    %367 = vmatprep.subr.mxu0 0.0
    %368 = vmatpush1.msra.mxu0 %v100
    %369 = vmatprep.subr.mxu0 0.0
    %370 = vmatpush1.msra.mxu0 %v101
    %371 = vmatprep.subr.mxu0 0.0
    %372 = vmatpush1.msra.mxu0 %v102
    %373 = vmatprep.subr.mxu0 0.0
    %374 = vmatpush1.msra.mxu0 %v103
    %375 = vmatprep.subr.mxu0 0.0
    %376 = vmatpush1.msra.mxu0 %v104
    %377 = vmatprep.subr.mxu0 0.0
    %378 = vmatpush1.msra.mxu0 %v105
    %379 = vmatprep.subr.mxu0 0.0
    %380 = vmatpush1.msra.mxu0 %v106
    %381 = vmatprep.subr.mxu0 0.0
    %382 = vmatpush1.msra.mxu0 %v107
    %383 = vmatprep.subr.mxu0 0.0
    %384 = vmatpush1.msra.mxu0 %v108
    %385 = vmatprep.subr.mxu0 0.0
    %386 = vmatpush1.msra.mxu0 %v109
    %387 = vmatprep.subr.mxu0 0.0
    %388 = vmatpush1.msra.mxu0 %v110
    %389 = vmatprep.subr.mxu0 0.0
    %390 = vmatpush1.msra.mxu0 %v111
    %391 = vmatprep.subr.mxu0 0.0
    %392 = vmatpush1.msra.mxu0 %v112
    %393 = vmatprep.mubr.f32.mxu0 %v179
    %394 = vmatmul.mubr.f32.gmra.mrb[0].mxu0 %v171
    %v395 = vpop.f32.mrb[0].mxu0
    %v396 = vadd.f32 %v326, %v395
    %v397 = vpop.f32.mrb[0].mxu0
    %398 = vdwg.mxu0
    %399 = vmatprep.subr.mxu0 0.0
    %400 = vmatpush1.msra.mxu0 %v113
    %401 = vmatprep.subr.mxu0 0.0
    %402 = vmatpush1.msra.mxu0 %v114
    %403 = vmatprep.subr.mxu0 0.0
    %404 = vmatpush1.msra.mxu0 %v115
    %405 = vmatprep.subr.mxu0 0.0
    %406 = vmatpush1.msra.mxu0 %v116
    %407 = vmatprep.subr.mxu0 0.0
    %408 = vmatpush1.msra.mxu0 %v117
    %409 = vmatprep.subr.mxu0 0.0
    %410 = vmatpush1.msra.mxu0 %v118
    %411 = vmatprep.subr.mxu0 0.0
    %412 = vmatpush1.msra.mxu0 %v119
    %413 = vmatprep.subr.mxu0 0.0
    %414 = vmatpush1.msra.mxu0 %v120
    %415 = vmatprep.subr.mxu0 0.0
    %416 = vmatpush1.msra.mxu0 %v121
    %417 = vmatprep.subr.mxu0 0.0
    %418 = vmatpush1.msra.mxu0 %v122
    %419 = vmatprep.subr.mxu0 0.0
    %420 = vmatpush1.msra.mxu0 %v123
    %421 = vmatprep.subr.mxu0 0.0
    %422 = vmatpush1.msra.mxu0 %v124
    %423 = vmatprep.subr.mxu0 0.0
    %424 = vmatpush1.msra.mxu0 %v125
    %425 = vmatprep.subr.mxu0 0.0
    %426 = vmatpush1.msra.mxu0 %v126
    %427 = vmatprep.subr.mxu0 0.0
    %428 = vmatpush1.msra.mxu0 %v127
    %429 = vmatprep.subr.mxu0 0.0
    %430 = vmatpush1.msra.mxu0 %v128
    %431 = vmatprep.subr.mxu0 0.0
    %432 = vmatpush1.msra.mxu0 %v129
    %433 = vmatprep.subr.mxu0 0.0
    %434 = vmatpush1.msra.mxu0 %v130
    %435 = vmatprep.subr.mxu0 0.0
    %436 = vmatpush1.msra.mxu0 %v131
    %437 = vmatprep.subr.mxu0 0.0
    %438 = vmatpush1.msra.mxu0 %v132
    %439 = vmatprep.subr.mxu0 0.0
    %440 = vmatpush1.msra.mxu0 %v133
    %441 = vmatprep.subr.mxu0 0.0
    %442 = vmatpush1.msra.mxu0 %v134
    %443 = vmatprep.subr.mxu0 0.0
    %444 = vmatpush1.msra.mxu0 %v135
    %445 = vmatprep.subr.mxu0 0.0
    %446 = vmatpush1.msra.mxu0 %v136
    %447 = vmatprep.subr.mxu0 0.0
    %448 = vmatpush1.msra.mxu0 %v137
    %449 = vmatprep.subr.mxu0 0.0
    %450 = vmatpush1.msra.mxu0 %v138
    %451 = vmatprep.subr.mxu0 0.0
    %452 = vmatpush1.msra.mxu0 %v139
    %453 = vmatprep.subr.mxu0 0.0
    %454 = vmatpush1.msra.mxu0 %v140
    %455 = vmatprep.subr.mxu0 0.0
    %456 = vmatpush1.msra.mxu0 %v141
    %457 = vmatprep.subr.mxu0 0.0
    %458 = vmatpush1.msra.mxu0 %v142
    %459 = vmatprep.subr.mxu0 0.0
    %460 = vmatpush1.msra.mxu0 %v143
    %461 = vmatprep.subr.mxu0 0.0
    %462 = vmatpush1.msra.mxu0 %v144
    %463 = vmatprep.mubr.f32.mxu0 %v180
    %464 = vmatmul.mubr.f32.gmra.mrb[0].mxu0 %v178
    %v465 = vpop.f32.mrb[0].mxu0
    %v466 = vadd.f32 %v396, %v465
    %v467 = vpop.f32.mrb[0].mxu0
    %468 = vdwg.mxu0
    %v469 = vmul.f32 %v466, 0.03125
    %v470 = vld [vmem:[%s2] sm:$0x1]
    %v472 = vlaneseq
    %v473 = vshrl.u32 %v472, 7
    %v474 = vsub.s32 0, %v473
    %v475 = vrot.slane %v470, %v474
    %v477 = vadd.f32 %v469, %v475
    %vm478 = vcmp.ge.f32.partialorder %v477, 0.0
    %v479 = vmul.f32 %v477, 0.2
    %v480 = vsel %vm478, %v477, %v479
    %v481 = vmul.f32 %v480, 1.4142135
    %vm482 = vcmask 254976
    %483 = vst.msk [vmem:[#allocation2] sm:$0x3] %vm482, %v481
    // Predicated region
    $region14: #{tpu_custom_call.1} parent=1 // pred_check
      _
    $region15: #{tpu_custom_call.1} parent=1 // pred_check_branch
      %485 = sbr.rel (0) target = $region17
    $region16: #{tpu_custom_call.1} parent=1 // pred_region
      %s487 = ssub.s32 32, 32
      %488 = vsyncadd [#allocation3], %s487
      %s490 = sshll.u32 [#allocation2], 4
      %s491 = int_to_ptr.vmem [resolvable:$true] %s490
      %493 = dma.vmem_to_hbm [thread:$0]  %s491, 32, %s3, [#allocation3]
    $region17: #{tpu_custom_call.1} parent=1 // pred_fallthru
      _
    // Predicated region
    $region18: #{tpu_custom_call.1} parent=1 // pred_check
      _
    $region19: #{tpu_custom_call.1} parent=1 // pred_check_branch
      %495 = sbr.rel (0) target = $region21
    $region20: #{tpu_custom_call.1} parent=1 // pred_region
      %496 = dma.done [#allocation3], 32
    $region21: #{tpu_custom_call.1} parent=1 // pred_fallthru
      _
    %497 = vsyncpa [#allocation3], 1

</llo_original>
